<compile_context>
chip_gen: v7x
topology: tpu7x:2x2x1
jax: 0.10.0
libtpu: 0.0.40
codegen_flags: <defaults>
</compile_context>

<pallas_src>
import functools

import jax
import jax.numpy as jnp
from jax.experimental import pallas as pl
from jax.experimental.pallas import tpu as pltpu


def _linear_kernel(x_ref, w_ref, b_ref, o_ref):
    """One (tm, N) output tile: full-K bf16 matmul with f32 accumulation + bias."""
    acc = jnp.dot(x_ref[...], w_ref[...], preferred_element_type=jnp.float32)
    o_ref[...] = (acc + b_ref[...]).astype(o_ref.dtype)


def _round_up(a, m):
    return ((a + m - 1) // m) * m


@functools.partial(jax.jit, static_argnames=("tm_max",))
def classifier_swint_forward(x, W, b, *, tm_max=256):
    """logits = x @ W.T + b  (PyTorch nn.Linear(1024, num_classes) semantics).

    x: (M, 1024) float32, W: (num_classes, 1024) float32, b: (num_classes,) float32.
    Returns (M, num_classes) float32.
    """
    M, K = x.shape
    N, K_w = W.shape
    assert K == K_w, "feature-dim mismatch between x and W"
    assert K % 128 == 0, "feature dim must be lane-aligned (1024 for SwinT)"

    # bf16 compute inputs (halves HBM traffic for the weight); f32 accumulation in-kernel.
    w_t = W.T.astype(jnp.bfloat16)             # (K, N), pre-transposed for (M,K)x(K,N)
    b2 = b.reshape(1, N).astype(jnp.float32)   # (1, N)

    # Tile only over the batch dim; full K and full N per block.
    m_pad = _round_up(M, 8)
    if m_pad > tm_max:
        m_pad = _round_up(M, tm_max)
        tm = tm_max
    else:
        tm = m_pad

    x_bf = x.astype(jnp.bfloat16)
    if m_pad != M:
        x_bf = jnp.pad(x_bf, ((0, m_pad - M), (0, 0)))

    grid = (m_pad // tm,)

    out = pl.pallas_call(
        _linear_kernel,
        out_shape=jax.ShapeDtypeStruct((m_pad, N), jnp.float32),
        grid_spec=pltpu.PrefetchScalarGridSpec(
            num_scalar_prefetch=0,
            grid=grid,
            in_specs=[
                pl.BlockSpec((tm, K), lambda i: (i, 0)),   # activations tile (full K)
                pl.BlockSpec((K, N), lambda i: (0, 0)),    # full W.T, resident across grid
                pl.BlockSpec((1, N), lambda i: (0, 0)),    # full bias, resident across grid
            ],
            out_specs=pl.BlockSpec((tm, N), lambda i: (i, 0)),
        ),
        compiler_params=pltpu.CompilerParams(
            dimension_semantics=("parallel",),
        ),
    )(x_bf, w_t, b2)

    return out[:M]


def make_params(num_classes=256, in_features=1024, seed=0):
    """Deterministic synthetic params matching nn.Linear(1024, num_classes) init."""
    kw, kb = jax.random.split(jax.random.PRNGKey(seed))
    bound = 1.0 / jnp.sqrt(in_features)
    W = jax.random.uniform(kw, (num_classes, in_features), jnp.float32, -bound, bound)
    b = jax.random.uniform(kb, (num_classes,), jnp.float32, -bound, bound)
    return W, b


if __name__ == "__main__":
    # Small, module-consistent shapes: batch=8, features=1024 (fixed by the module),
    # num_classes=256 (small stand-in for the default 1000; full-N blocks also
    # handle 1000 without padding).
    batch = 8
    in_features = 1024
    num_classes = 256

    key = jax.random.PRNGKey(0)
    x = jax.random.normal(key, (batch, in_features), dtype=jnp.float32)
    W, b = make_params(num_classes=num_classes, in_features=in_features, seed=0)

    logits = classifier_swint_forward(x, W, b)
    logits = jax.block_until_ready(logits)

    assert logits.shape == (batch, num_classes)
    assert logits.dtype == jnp.float32

    # Tight check vs a reference using the same bf16 inputs / f32 accumulation.
    ref_bf16 = (
        jnp.dot(
            x.astype(jnp.bfloat16),
            W.T.astype(jnp.bfloat16),
            preferred_element_type=jnp.float32,
        )
        + b[None, :]
    )
    assert jnp.allclose(logits, ref_bf16, atol=1e-3, rtol=1e-3), "mismatch vs bf16 reference"

    # Looser check vs the pure-f32 PyTorch math (bf16 input rounding over K=1024).
    ref_f32 = x @ W.T + b[None, :]
    assert jnp.allclose(logits, ref_f32, atol=5e-2, rtol=5e-2), "mismatch vs f32 reference"

    print("KERNEL_OK")
</pallas_src>

<mosaic_0001>
module attributes {stable_mosaic.version = 11 : i64} {
  func.func @_linear_kernel(%arg0: i32, %arg1: memref<8x1024xbf16, #tpu.memory_space<vmem>>, %arg2: memref<1024x256xbf16, #tpu.memory_space<vmem>>, %arg3: memref<1x256xf32, #tpu.memory_space<vmem>>, %arg4: memref<8x256xf32, #tpu.memory_space<vmem>>) attributes {dimension_semantics = [#tpu.dimension_semantics<parallel>], iteration_bounds = array<i64: 1>, scalar_prefetch = 0 : i64, scratch_operands = 0 : i64, tpu.core_type = #tpu.core_type<tc>, window_params = [{transform_indices = @transform_0, window_bounds = array<i64: 8, 1024>}, {pipeline_mode = #tpu.pipeline_mode<synchronous>, transform_indices = @transform_1, window_bounds = array<i64: 1024, 256>}, {pipeline_mode = #tpu.pipeline_mode<synchronous>, transform_indices = @transform_2, window_bounds = array<i64: 1, 256>}, {transform_indices = @transform_3, window_bounds = array<i64: 8, 256>}]} {
    %c0 = arith.constant 0 : index
    %c0_0 = arith.constant 0 : index
    %0 = vector.load %arg1[%c0, %c0_0] : memref<8x1024xbf16, #tpu.memory_space<vmem>>, vector<8x1024xbf16>
    %c0_1 = arith.constant 0 : index
    %c0_2 = arith.constant 0 : index
    %1 = vector.load %arg2[%c0_1, %c0_2] : memref<1024x256xbf16, #tpu.memory_space<vmem>>, vector<1024x256xbf16>
    %cst = arith.constant dense<0.000000e+00> : vector<8x256xf32>
    %2 = tpu.matmul %0, %1, %cst {dimension_numbers = #tpu.dot_dimension_numbers<[1], [0], [0], [1], [0, 0, 1, 1], [], []>} : vector<8x1024xbf16>, vector<1024x256xbf16>, vector<8x256xf32> -> vector<8x256xf32>
    %c0_3 = arith.constant 0 : index
    %c0_4 = arith.constant 0 : index
    %3 = vector.load %arg3[%c0_3, %c0_4] : memref<1x256xf32, #tpu.memory_space<vmem>>, vector<1x256xf32>
    %4 = vector.broadcast %3 : vector<1x256xf32> to vector<8x256xf32>
    %5 = arith.addf %2, %4 : vector<8x256xf32>
    %c0_5 = arith.constant 0 : index
    %c0_6 = arith.constant 0 : index
    %6 = vector.load %arg4[%c0_5, %c0_6] : memref<8x256xf32, #tpu.memory_space<vmem>>, vector<8x256xf32>
    tpu.vector_store %arg4[%c0_5, %c0_6], %5 {strides = array<i32>} : memref<8x256xf32, #tpu.memory_space<vmem>>, vector<8x256xf32>,
    return
  }
  func.func @transform_0(%arg0: i32) -> (i32, i32) {
    %c0_i32 = arith.constant 0 : i32
    %c0_i32_0 = arith.constant 0 : i32
    return %arg0, %c0_i32 : i32, i32
  }
  func.func @transform_1(%arg0: i32) -> (i32, i32) {
    %c0_i32 = arith.constant 0 : i32
    %c0_i32_0 = arith.constant 0 : i32
    %c0_i32_1 = arith.constant 0 : i32
    return %c0_i32, %c0_i32_0 : i32, i32
  }
  func.func @transform_2(%arg0: i32) -> (i32, i32) {
    %c0_i32 = arith.constant 0 : i32
    %c0_i32_0 = arith.constant 0 : i32
    %c0_i32_1 = arith.constant 0 : i32
    return %c0_i32, %c0_i32_0 : i32, i32
  }
  func.func @transform_3(%arg0: i32) -> (i32, i32) {
    %c0_i32 = arith.constant 0 : i32
    %c0_i32_0 = arith.constant 0 : i32
    return %arg0, %c0_i32 : i32, i32
  }
}

</mosaic_0001>

<llo_original>
// kernel: classifier_swint_forward.1
$region0: #{classifier_swint_forward.1}
  #allocation0 [shape = 'u32[]', space=smem, size = 0x4, offset = 0x4, fixed_abs, tag = 'smem constant byte address 0x4 - core index']
  #allocation1 [shape = 'u32[144,128]{1,0:T(1,128)}', space=vmem, size = 0x12000, scoped, tag = 'internal scratch']
  %s0 = inlined_call_operand.vmem [shape: bf16[8,1024], index: 0, kind: input, shape index: {}]
  %s1 = inlined_call_operand.vmem [shape: bf16[1024,256], index: 1, kind: input, shape index: {}]
  %s2 = inlined_call_operand.vmem [shape: f32[1,256], index: 2, kind: input, shape index: {}]
  %s3 = inlined_call_operand.hbm [shape: f32[8,256], index: 3, kind: output, shape index: {}]
  %s4 = sld [smem:[#allocation0]]
  $region22: #{classifier_swint_forward.1} parent=0
    _
  %s6 = ssub.s32 1, %s4
  %s7 = scalar_select 0, %s6, %s4
  $region1: #{classifier_swint_forward.1} parent=0
    #allocation2 [shape = 'u8[8192]{0}', space=vmem, size = 0x2000, scoped, tag = 'output window, operand 0, single buffered']
    #allocation3 [shape = 's32[1]{0}', space=sflag, size = 0x4, scoped, tag = 'scoped memory for classifier_swint_forward.1']
    %8 = vsyncpa [#allocation3], 0
    // Predicated region
    $region2: #{classifier_swint_forward.1} parent=1 // pred_check
      _
    $region3: #{classifier_swint_forward.1} parent=1 // pred_check_branch
      %10 = sbr.rel (0) target = $region5
    $region4: #{classifier_swint_forward.1} parent=1 // pred_region
      _
    $region5: #{classifier_swint_forward.1} parent=1 // pred_fallthru
      _
    // Predicated region
    $region6: #{classifier_swint_forward.1} parent=1 // pred_check
      _
    $region7: #{classifier_swint_forward.1} parent=1 // pred_check_branch
      %12 = sbr.rel (0) target = $region9
    $region8: #{classifier_swint_forward.1} parent=1 // pred_region
      _
    $region9: #{classifier_swint_forward.1} parent=1 // pred_fallthru
      _
    // Predicated region
    $region10: #{classifier_swint_forward.1} parent=1 // pred_check
      _
    $region11: #{classifier_swint_forward.1} parent=1 // pred_check_branch
      %14 = sbr.rel (0) target = $region13
    $region12: #{classifier_swint_forward.1} parent=1 // pred_region
      _
    $region13: #{classifier_swint_forward.1} parent=1 // pred_fallthru
      _
    %v15 = vld [vmem:[%s0] sm:$0xff]
    %v16 = vld [vmem:[%s0 + $0x8] sm:$0xff]
    %v17 = vld [vmem:[%s0 + $0x10] sm:$0xff]
    %v18 = vld [vmem:[%s0 + $0x18] sm:$0xff]
    %v19 = vld [vmem:[%s1] sm:$0xff]
    %v20 = vld [vmem:[%s1 + $0x8] sm:$0xff]
    %v21 = vld [vmem:[%s1 + $0x10] sm:$0xff]
    %v22 = vld [vmem:[%s1 + $0x18] sm:$0xff]
    %v23 = vld [vmem:[%s1 + $0x20] sm:$0xff]
    %v24 = vld [vmem:[%s1 + $0x28] sm:$0xff]
    %v25 = vld [vmem:[%s1 + $0x30] sm:$0xff]
    %v26 = vld [vmem:[%s1 + $0x38] sm:$0xff]
    %v27 = vld [vmem:[%s1 + $0x40] sm:$0xff]
    %v28 = vld [vmem:[%s1 + $0x48] sm:$0xff]
    %v29 = vld [vmem:[%s1 + $0x50] sm:$0xff]
    %v30 = vld [vmem:[%s1 + $0x58] sm:$0xff]
    %v31 = vld [vmem:[%s1 + $0x60] sm:$0xff]
    %v32 = vld [vmem:[%s1 + $0x68] sm:$0xff]
    %v33 = vld [vmem:[%s1 + $0x70] sm:$0xff]
    %v34 = vld [vmem:[%s1 + $0x78] sm:$0xff]
    %v35 = vld [vmem:[%s1 + $0x80] sm:$0xff]
    %v36 = vld [vmem:[%s1 + $0x88] sm:$0xff]
    %v37 = vld [vmem:[%s1 + $0x90] sm:$0xff]
    %v38 = vld [vmem:[%s1 + $0x98] sm:$0xff]
    %v39 = vld [vmem:[%s1 + $0xa0] sm:$0xff]
    %v40 = vld [vmem:[%s1 + $0xa8] sm:$0xff]
    %v41 = vld [vmem:[%s1 + $0xb0] sm:$0xff]
    %v42 = vld [vmem:[%s1 + $0xb8] sm:$0xff]
    %v43 = vld [vmem:[%s1 + $0xc0] sm:$0xff]
    %v44 = vld [vmem:[%s1 + $0xc8] sm:$0xff]
    %v45 = vld [vmem:[%s1 + $0xd0] sm:$0xff]
    %v46 = vld [vmem:[%s1 + $0xd8] sm:$0xff]
    %v47 = vld [vmem:[%s1 + $0xe0] sm:$0xff]
    %v48 = vld [vmem:[%s1 + $0xe8] sm:$0xff]
    %v49 = vld [vmem:[%s1 + $0xf0] sm:$0xff]
    %v50 = vld [vmem:[%s1 + $0xf8] sm:$0xff]
    %v51 = vld [vmem:[%s1 + $0x100] sm:$0xff]
    %v52 = vld [vmem:[%s1 + $0x108] sm:$0xff]
    %v53 = vld [vmem:[%s1 + $0x110] sm:$0xff]
    %v54 = vld [vmem:[%s1 + $0x118] sm:$0xff]
    %v55 = vld [vmem:[%s1 + $0x120] sm:$0xff]
    %v56 = vld [vmem:[%s1 + $0x128] sm:$0xff]
    %v57 = vld [vmem:[%s1 + $0x130] sm:$0xff]
    %v58 = vld [vmem:[%s1 + $0x138] sm:$0xff]
    %v59 = vld [vmem:[%s1 + $0x140] sm:$0xff]
    %v60 = vld [vmem:[%s1 + $0x148] sm:$0xff]
    %v61 = vld [vmem:[%s1 + $0x150] sm:$0xff]
    %v62 = vld [vmem:[%s1 + $0x158] sm:$0xff]
    %v63 = vld [vmem:[%s1 + $0x160] sm:$0xff]
    %v64 = vld [vmem:[%s1 + $0x168] sm:$0xff]
    %v65 = vld [vmem:[%s1 + $0x170] sm:$0xff]
    %v66 = vld [vmem:[%s1 + $0x178] sm:$0xff]
    %v67 = vld [vmem:[%s1 + $0x180] sm:$0xff]
    %v68 = vld [vmem:[%s1 + $0x188] sm:$0xff]
    %v69 = vld [vmem:[%s1 + $0x190] sm:$0xff]
    %v70 = vld [vmem:[%s1 + $0x198] sm:$0xff]
    %v71 = vld [vmem:[%s1 + $0x1a0] sm:$0xff]
    %v72 = vld [vmem:[%s1 + $0x1a8] sm:$0xff]
    %v73 = vld [vmem:[%s1 + $0x1b0] sm:$0xff]
    %v74 = vld [vmem:[%s1 + $0x1b8] sm:$0xff]
    %v75 = vld [vmem:[%s1 + $0x1c0] sm:$0xff]
    %v76 = vld [vmem:[%s1 + $0x1c8] sm:$0xff]
    %v77 = vld [vmem:[%s1 + $0x1d0] sm:$0xff]
    %v78 = vld [vmem:[%s1 + $0x1d8] sm:$0xff]
    %v79 = vld [vmem:[%s1 + $0x1e0] sm:$0xff]
    %v80 = vld [vmem:[%s1 + $0x1e8] sm:$0xff]
    %v81 = vld [vmem:[%s1 + $0x1f0] sm:$0xff]
    %v82 = vld [vmem:[%s1 + $0x1f8] sm:$0xff]
    %v83 = vld [vmem:[%s1 + $0x200] sm:$0xff]
    %v84 = vld [vmem:[%s1 + $0x208] sm:$0xff]
    %v85 = vld [vmem:[%s1 + $0x210] sm:$0xff]
    %v86 = vld [vmem:[%s1 + $0x218] sm:$0xff]
    %v87 = vld [vmem:[%s1 + $0x220] sm:$0xff]
    %v88 = vld [vmem:[%s1 + $0x228] sm:$0xff]
    %v89 = vld [vmem:[%s1 + $0x230] sm:$0xff]
    %v90 = vld [vmem:[%s1 + $0x238] sm:$0xff]
    %v91 = vld [vmem:[%s1 + $0x240] sm:$0xff]
    %v92 = vld [vmem:[%s1 + $0x248] sm:$0xff]
    %v93 = vld [vmem:[%s1 + $0x250] sm:$0xff]
    %v94 = vld [vmem:[%s1 + $0x258] sm:$0xff]
    %v95 = vld [vmem:[%s1 + $0x260] sm:$0xff]
    %v96 = vld [vmem:[%s1 + $0x268] sm:$0xff]
    %v97 = vld [vmem:[%s1 + $0x270] sm:$0xff]
    %v98 = vld [vmem:[%s1 + $0x278] sm:$0xff]
    %v99 = vld [vmem:[%s1 + $0x280] sm:$0xff]
    %v100 = vld [vmem:[%s1 + $0x288] sm:$0xff]
    %v101 = vld [vmem:[%s1 + $0x290] sm:$0xff]
    %v102 = vld [vmem:[%s1 + $0x298] sm:$0xff]
    %v103 = vld [vmem:[%s1 + $0x2a0] sm:$0xff]
    %v104 = vld [vmem:[%s1 + $0x2a8] sm:$0xff]
    %v105 = vld [vmem:[%s1 + $0x2b0] sm:$0xff]
    %v106 = vld [vmem:[%s1 + $0x2b8] sm:$0xff]
    %v107 = vld [vmem:[%s1 + $0x2c0] sm:$0xff]
    %v108 = vld [vmem:[%s1 + $0x2c8] sm:$0xff]
    %v109 = vld [vmem:[%s1 + $0x2d0] sm:$0xff]
    %v110 = vld [vmem:[%s1 + $0x2d8] sm:$0xff]
    %v111 = vld [vmem:[%s1 + $0x2e0] sm:$0xff]
    %v112 = vld [vmem:[%s1 + $0x2e8] sm:$0xff]
    %v113 = vld [vmem:[%s1 + $0x2f0] sm:$0xff]
    %v114 = vld [vmem:[%s1 + $0x2f8] sm:$0xff]
    %v115 = vld [vmem:[%s1 + $0x300] sm:$0xff]
    %v116 = vld [vmem:[%s1 + $0x308] sm:$0xff]
    %v117 = vld [vmem:[%s1 + $0x310] sm:$0xff]
    %v118 = vld [vmem:[%s1 + $0x318] sm:$0xff]
    %v119 = vld [vmem:[%s1 + $0x320] sm:$0xff]
    %v120 = vld [vmem:[%s1 + $0x328] sm:$0xff]
    %v121 = vld [vmem:[%s1 + $0x330] sm:$0xff]
    %v122 = vld [vmem:[%s1 + $0x338] sm:$0xff]
    %v123 = vld [vmem:[%s1 + $0x340] sm:$0xff]
    %v124 = vld [vmem:[%s1 + $0x348] sm:$0xff]
    %v125 = vld [vmem:[%s1 + $0x350] sm:$0xff]
    %v126 = vld [vmem:[%s1 + $0x358] sm:$0xff]
    %v127 = vld [vmem:[%s1 + $0x360] sm:$0xff]
    %v128 = vld [vmem:[%s1 + $0x368] sm:$0xff]
    %v129 = vld [vmem:[%s1 + $0x370] sm:$0xff]
    %v130 = vld [vmem:[%s1 + $0x378] sm:$0xff]
    %v131 = vld [vmem:[%s1 + $0x380] sm:$0xff]
    %v132 = vld [vmem:[%s1 + $0x388] sm:$0xff]
    %v133 = vld [vmem:[%s1 + $0x390] sm:$0xff]
    %v134 = vld [vmem:[%s1 + $0x398] sm:$0xff]
    %v135 = vld [vmem:[%s1 + $0x3a0] sm:$0xff]
    %v136 = vld [vmem:[%s1 + $0x3a8] sm:$0xff]
    %v137 = vld [vmem:[%s1 + $0x3b0] sm:$0xff]
    %v138 = vld [vmem:[%s1 + $0x3b8] sm:$0xff]
    %v139 = vld [vmem:[%s1 + $0x3c0] sm:$0xff]
    %v140 = vld [vmem:[%s1 + $0x3c8] sm:$0xff]
    %v141 = vld [vmem:[%s1 + $0x3d0] sm:$0xff]
    %v142 = vld [vmem:[%s1 + $0x3d8] sm:$0xff]
    %v143 = vld [vmem:[%s1 + $0x3e0] sm:$0xff]
    %v144 = vld [vmem:[%s1 + $0x3e8] sm:$0xff]
    %v145 = vld [vmem:[%s1 + $0x3f0] sm:$0xff]
    %v146 = vld [vmem:[%s1 + $0x3f8] sm:$0xff]
    %v147 = vld [vmem:[%s2] sm:$0x3]
    %v149 = vlaneseq
    %v150 = vshrl.u32 %v149, 7
    %v151 = vsub.s32 0, %v150
    %v152 = vrot.slane %v147, %v151
    %v153 = vlaneseq
    %v154 = vshrl.u32 %v153, 7
    %v155 = vsub.s32 1, %v154
    %v156 = vrot.slane %v147, %v155
    %v163 = vunpack.c.l.b16 %v15
    %v164 = vunpack.c.h.b16 %v15
    %v165 = vunpack.c.l.b16 %v16
    %v166 = vunpack.c.h.b16 %v16
    %v167 = vunpack.c.l.b16 %v17
    %v168 = vunpack.c.h.b16 %v17
    %v169 = vunpack.c.l.b16 %v18
    %v170 = vunpack.c.h.b16 %v18
    %v171 = vpack.c.b16 %v163, %v163
    %v172 = vpack.c.b16 %v164, %v164
    %v173 = vpack.c.b16 %v165, %v165
    %v174 = vpack.c.b16 %v166, %v166
    %v175 = vpack.c.b16 %v167, %v167
    %v176 = vpack.c.b16 %v168, %v168
    %v177 = vpack.c.b16 %v169, %v169
    %v178 = vpack.c.b16 %v170, %v170
    %v315 = vunpack.c.l.b16 %v19
    %v316 = vunpack.c.h.b16 %v19
    %v317 = vunpack.c.l.b16 %v20
    %v318 = vunpack.c.h.b16 %v20
    %v319 = vunpack.c.l.b16 %v21
    %v320 = vunpack.c.h.b16 %v21
    %v321 = vunpack.c.l.b16 %v22
    %v322 = vunpack.c.h.b16 %v22
    %v323 = vunpack.c.l.b16 %v23
    %v324 = vunpack.c.h.b16 %v23
    %v325 = vunpack.c.l.b16 %v24
    %v326 = vunpack.c.h.b16 %v24
    %v327 = vunpack.c.l.b16 %v25
    %v328 = vunpack.c.h.b16 %v25
    %v329 = vunpack.c.l.b16 %v26
    %v330 = vunpack.c.h.b16 %v26
    %v331 = vunpack.c.l.b16 %v27
    %v332 = vunpack.c.h.b16 %v27
    %v333 = vunpack.c.l.b16 %v28
    %v334 = vunpack.c.h.b16 %v28
    %v335 = vunpack.c.l.b16 %v29
    %v336 = vunpack.c.h.b16 %v29
    %v337 = vunpack.c.l.b16 %v30
    %v338 = vunpack.c.h.b16 %v30
    %v339 = vunpack.c.l.b16 %v31
    %v340 = vunpack.c.h.b16 %v31
    %v341 = vunpack.c.l.b16 %v32
    %v342 = vunpack.c.h.b16 %v32
    %v343 = vunpack.c.l.b16 %v33
    %v344 = vunpack.c.h.b16 %v33
    %v345 = vunpack.c.l.b16 %v34
    %v346 = vunpack.c.h.b16 %v34
    %v347 = vunpack.c.l.b16 %v35
    %v348 = vunpack.c.h.b16 %v35
    %v349 = vunpack.c.l.b16 %v36
    %v350 = vunpack.c.h.b16 %v36
    %v351 = vunpack.c.l.b16 %v37
    %v352 = vunpack.c.h.b16 %v37
    %v353 = vunpack.c.l.b16 %v38
    %v354 = vunpack.c.h.b16 %v38
    %v355 = vunpack.c.l.b16 %v39
    %v356 = vunpack.c.h.b16 %v39
    %v357 = vunpack.c.l.b16 %v40
    %v358 = vunpack.c.h.b16 %v40
    %v359 = vunpack.c.l.b16 %v41
    %v360 = vunpack.c.h.b16 %v41
    %v361 = vunpack.c.l.b16 %v42
    %v362 = vunpack.c.h.b16 %v42
    %v363 = vunpack.c.l.b16 %v43
    %v364 = vunpack.c.h.b16 %v43
    %v365 = vunpack.c.l.b16 %v44
    %v366 = vunpack.c.h.b16 %v44
    %v367 = vunpack.c.l.b16 %v45
    %v368 = vunpack.c.h.b16 %v45
    %v369 = vunpack.c.l.b16 %v46
    %v370 = vunpack.c.h.b16 %v46
    %v371 = vunpack.c.l.b16 %v47
    %v372 = vunpack.c.h.b16 %v47
    %v373 = vunpack.c.l.b16 %v48
    %v374 = vunpack.c.h.b16 %v48
    %v375 = vunpack.c.l.b16 %v49
    %v376 = vunpack.c.h.b16 %v49
    %v377 = vunpack.c.l.b16 %v50
    %v378 = vunpack.c.h.b16 %v50
    %v379 = vunpack.c.l.b16 %v51
    %v380 = vunpack.c.h.b16 %v51
    %v381 = vunpack.c.l.b16 %v52
    %v382 = vunpack.c.h.b16 %v52
    %v383 = vunpack.c.l.b16 %v53
    %v384 = vunpack.c.h.b16 %v53
    %v385 = vunpack.c.l.b16 %v54
    %v386 = vunpack.c.h.b16 %v54
    %v387 = vunpack.c.l.b16 %v55
    %v388 = vunpack.c.h.b16 %v55
    %v389 = vunpack.c.l.b16 %v56
    %v390 = vunpack.c.h.b16 %v56
    %v391 = vunpack.c.l.b16 %v57
    %v392 = vunpack.c.h.b16 %v57
    %v393 = vunpack.c.l.b16 %v58
    %v394 = vunpack.c.h.b16 %v58
    %v395 = vunpack.c.l.b16 %v59
    %v396 = vunpack.c.h.b16 %v59
    %v397 = vunpack.c.l.b16 %v60
    %v398 = vunpack.c.h.b16 %v60
    %v399 = vunpack.c.l.b16 %v61
    %v400 = vunpack.c.h.b16 %v61
    %v401 = vunpack.c.l.b16 %v62
    %v402 = vunpack.c.h.b16 %v62
    %v403 = vunpack.c.l.b16 %v63
    %v404 = vunpack.c.h.b16 %v63
    %v405 = vunpack.c.l.b16 %v64
    %v406 = vunpack.c.h.b16 %v64
    %v407 = vunpack.c.l.b16 %v65
    %v408 = vunpack.c.h.b16 %v65
    %v409 = vunpack.c.l.b16 %v66
    %v410 = vunpack.c.h.b16 %v66
    %v411 = vunpack.c.l.b16 %v67
    %v412 = vunpack.c.h.b16 %v67
    %v413 = vunpack.c.l.b16 %v68
    %v414 = vunpack.c.h.b16 %v68
    %v415 = vunpack.c.l.b16 %v69
    %v416 = vunpack.c.h.b16 %v69
    %v417 = vunpack.c.l.b16 %v70
    %v418 = vunpack.c.h.b16 %v70
    %v419 = vunpack.c.l.b16 %v71
    %v420 = vunpack.c.h.b16 %v71
    %v421 = vunpack.c.l.b16 %v72
    %v422 = vunpack.c.h.b16 %v72
    %v423 = vunpack.c.l.b16 %v73
    %v424 = vunpack.c.h.b16 %v73
    %v425 = vunpack.c.l.b16 %v74
    %v426 = vunpack.c.h.b16 %v74
    %v427 = vunpack.c.l.b16 %v75
    %v428 = vunpack.c.h.b16 %v75
    %v429 = vunpack.c.l.b16 %v76
    %v430 = vunpack.c.h.b16 %v76
    %v431 = vunpack.c.l.b16 %v77
    %v432 = vunpack.c.h.b16 %v77
    %v433 = vunpack.c.l.b16 %v78
    %v434 = vunpack.c.h.b16 %v78
    %v435 = vunpack.c.l.b16 %v79
    %v436 = vunpack.c.h.b16 %v79
    %v437 = vunpack.c.l.b16 %v80
    %v438 = vunpack.c.h.b16 %v80
    %v439 = vunpack.c.l.b16 %v81
    %v440 = vunpack.c.h.b16 %v81
    %v441 = vunpack.c.l.b16 %v82
    %v442 = vunpack.c.h.b16 %v82
    %v443 = vunpack.c.l.b16 %v83
    %v444 = vunpack.c.h.b16 %v83
    %v445 = vunpack.c.l.b16 %v84
    %v446 = vunpack.c.h.b16 %v84
    %v447 = vunpack.c.l.b16 %v85
    %v448 = vunpack.c.h.b16 %v85
    %v449 = vunpack.c.l.b16 %v86
    %v450 = vunpack.c.h.b16 %v86
    %v451 = vunpack.c.l.b16 %v87
    %v452 = vunpack.c.h.b16 %v87
    %v453 = vunpack.c.l.b16 %v88
    %v454 = vunpack.c.h.b16 %v88
    %v455 = vunpack.c.l.b16 %v89
    %v456 = vunpack.c.h.b16 %v89
    %v457 = vunpack.c.l.b16 %v90
    %v458 = vunpack.c.h.b16 %v90
    %v459 = vunpack.c.l.b16 %v91
    %v460 = vunpack.c.h.b16 %v91
    %v461 = vunpack.c.l.b16 %v92
    %v462 = vunpack.c.h.b16 %v92
    %v463 = vunpack.c.l.b16 %v93
    %v464 = vunpack.c.h.b16 %v93
    %v465 = vunpack.c.l.b16 %v94
    %v466 = vunpack.c.h.b16 %v94
    %v467 = vunpack.c.l.b16 %v95
    %v468 = vunpack.c.h.b16 %v95
    %v469 = vunpack.c.l.b16 %v96
    %v470 = vunpack.c.h.b16 %v96
    %v471 = vunpack.c.l.b16 %v97
    %v472 = vunpack.c.h.b16 %v97
    %v473 = vunpack.c.l.b16 %v98
    %v474 = vunpack.c.h.b16 %v98
    %v475 = vunpack.c.l.b16 %v99
    %v476 = vunpack.c.h.b16 %v99
    %v477 = vunpack.c.l.b16 %v100
    %v478 = vunpack.c.h.b16 %v100
    %v479 = vunpack.c.l.b16 %v101
    %v480 = vunpack.c.h.b16 %v101
    %v481 = vunpack.c.l.b16 %v102
    %v482 = vunpack.c.h.b16 %v102
    %v483 = vunpack.c.l.b16 %v103
    %v484 = vunpack.c.h.b16 %v103
    %v485 = vunpack.c.l.b16 %v104
    %v486 = vunpack.c.h.b16 %v104
    %v487 = vunpack.c.l.b16 %v105
    %v488 = vunpack.c.h.b16 %v105
    %v489 = vunpack.c.l.b16 %v106
    %v490 = vunpack.c.h.b16 %v106
    %v491 = vunpack.c.l.b16 %v107
    %v492 = vunpack.c.h.b16 %v107
    %v493 = vunpack.c.l.b16 %v108
    %v494 = vunpack.c.h.b16 %v108
    %v495 = vunpack.c.l.b16 %v109
    %v496 = vunpack.c.h.b16 %v109
    %v497 = vunpack.c.l.b16 %v110
    %v498 = vunpack.c.h.b16 %v110
    %v499 = vunpack.c.l.b16 %v111
    %v500 = vunpack.c.h.b16 %v111
    %v501 = vunpack.c.l.b16 %v112
    %v502 = vunpack.c.h.b16 %v112
    %v503 = vunpack.c.l.b16 %v113
    %v504 = vunpack.c.h.b16 %v113
    %v505 = vunpack.c.l.b16 %v114
    %v506 = vunpack.c.h.b16 %v114
    %v507 = vunpack.c.l.b16 %v115
    %v508 = vunpack.c.h.b16 %v115
    %v509 = vunpack.c.l.b16 %v116
    %v510 = vunpack.c.h.b16 %v116
    %v511 = vunpack.c.l.b16 %v117
    %v512 = vunpack.c.h.b16 %v117
    %v513 = vunpack.c.l.b16 %v118
    %v514 = vunpack.c.h.b16 %v118
    %v515 = vunpack.c.l.b16 %v119
    %v516 = vunpack.c.h.b16 %v119
    %v517 = vunpack.c.l.b16 %v120
    %v518 = vunpack.c.h.b16 %v120
    %v519 = vunpack.c.l.b16 %v121
    %v520 = vunpack.c.h.b16 %v121
    %v521 = vunpack.c.l.b16 %v122
    %v522 = vunpack.c.h.b16 %v122
    %v523 = vunpack.c.l.b16 %v123
    %v524 = vunpack.c.h.b16 %v123
    %v525 = vunpack.c.l.b16 %v124
    %v526 = vunpack.c.h.b16 %v124
    %v527 = vunpack.c.l.b16 %v125
    %v528 = vunpack.c.h.b16 %v125
    %v529 = vunpack.c.l.b16 %v126
    %v530 = vunpack.c.h.b16 %v126
    %v531 = vunpack.c.l.b16 %v127
    %v532 = vunpack.c.h.b16 %v127
    %v533 = vunpack.c.l.b16 %v128
    %v534 = vunpack.c.h.b16 %v128
    %v535 = vunpack.c.l.b16 %v129
    %v536 = vunpack.c.h.b16 %v129
    %v537 = vunpack.c.l.b16 %v130
    %v538 = vunpack.c.h.b16 %v130
    %v539 = vunpack.c.l.b16 %v131
    %v540 = vunpack.c.h.b16 %v131
    %v541 = vunpack.c.l.b16 %v132
    %v542 = vunpack.c.h.b16 %v132
    %v543 = vunpack.c.l.b16 %v133
    %v544 = vunpack.c.h.b16 %v133
    %v545 = vunpack.c.l.b16 %v134
    %v546 = vunpack.c.h.b16 %v134
    %v547 = vunpack.c.l.b16 %v135
    %v548 = vunpack.c.h.b16 %v135
    %v549 = vunpack.c.l.b16 %v136
    %v550 = vunpack.c.h.b16 %v136
    %v551 = vunpack.c.l.b16 %v137
    %v552 = vunpack.c.h.b16 %v137
    %v553 = vunpack.c.l.b16 %v138
    %v554 = vunpack.c.h.b16 %v138
    %v555 = vunpack.c.l.b16 %v139
    %v556 = vunpack.c.h.b16 %v139
    %v557 = vunpack.c.l.b16 %v140
    %v558 = vunpack.c.h.b16 %v140
    %v559 = vunpack.c.l.b16 %v141
    %v560 = vunpack.c.h.b16 %v141
    %v561 = vunpack.c.l.b16 %v142
    %v562 = vunpack.c.h.b16 %v142
    %v563 = vunpack.c.l.b16 %v143
    %v564 = vunpack.c.h.b16 %v143
    %v565 = vunpack.c.l.b16 %v144
    %v566 = vunpack.c.h.b16 %v144
    %v567 = vunpack.c.l.b16 %v145
    %v568 = vunpack.c.h.b16 %v145
    %v569 = vunpack.c.l.b16 %v146
    %v570 = vunpack.c.h.b16 %v146
    %v571 = vpack.c.b16 %v317, %v315
    %v572 = vpack.c.b16 %v318, %v316
    %v573 = vpack.c.b16 %v321, %v319
    %v574 = vpack.c.b16 %v322, %v320
    %v575 = vpack.c.b16 %v325, %v323
    %v576 = vpack.c.b16 %v326, %v324
    %v577 = vpack.c.b16 %v329, %v327
    %v578 = vpack.c.b16 %v330, %v328
    %v579 = vpack.c.b16 %v333, %v331
    %v580 = vpack.c.b16 %v334, %v332
    %v581 = vpack.c.b16 %v337, %v335
    %v582 = vpack.c.b16 %v338, %v336
    %v583 = vpack.c.b16 %v341, %v339
    %v584 = vpack.c.b16 %v342, %v340
    %v585 = vpack.c.b16 %v345, %v343
    %v586 = vpack.c.b16 %v346, %v344
    %v587 = vpack.c.b16 %v349, %v347
    %v588 = vpack.c.b16 %v350, %v348
    %v589 = vpack.c.b16 %v353, %v351
    %v590 = vpack.c.b16 %v354, %v352
    %v591 = vpack.c.b16 %v357, %v355
    %v592 = vpack.c.b16 %v358, %v356
    %v593 = vpack.c.b16 %v361, %v359
    %v594 = vpack.c.b16 %v362, %v360
    %v595 = vpack.c.b16 %v365, %v363
    %v596 = vpack.c.b16 %v366, %v364
    %v597 = vpack.c.b16 %v369, %v367
    %v598 = vpack.c.b16 %v370, %v368
    %v599 = vpack.c.b16 %v373, %v371
    %v600 = vpack.c.b16 %v374, %v372
    %v601 = vpack.c.b16 %v377, %v375
    %v602 = vpack.c.b16 %v378, %v376
    %v603 = vpack.c.b16 %v381, %v379
    %v604 = vpack.c.b16 %v382, %v380
    %v605 = vpack.c.b16 %v385, %v383
    %v606 = vpack.c.b16 %v386, %v384
    %v607 = vpack.c.b16 %v389, %v387
    %v608 = vpack.c.b16 %v390, %v388
    %v609 = vpack.c.b16 %v393, %v391
    %v610 = vpack.c.b16 %v394, %v392
    %v611 = vpack.c.b16 %v397, %v395
    %v612 = vpack.c.b16 %v398, %v396
    %v613 = vpack.c.b16 %v401, %v399
    %v614 = vpack.c.b16 %v402, %v400
    %v615 = vpack.c.b16 %v405, %v403
    %v616 = vpack.c.b16 %v406, %v404
    %v617 = vpack.c.b16 %v409, %v407
    %v618 = vpack.c.b16 %v410, %v408
    %v619 = vpack.c.b16 %v413, %v411
    %v620 = vpack.c.b16 %v414, %v412
    %v621 = vpack.c.b16 %v417, %v415
    %v622 = vpack.c.b16 %v418, %v416
    %v623 = vpack.c.b16 %v421, %v419
    %v624 = vpack.c.b16 %v422, %v420
    %v625 = vpack.c.b16 %v425, %v423
    %v626 = vpack.c.b16 %v426, %v424
    %v627 = vpack.c.b16 %v429, %v427
    %v628 = vpack.c.b16 %v430, %v428
    %v629 = vpack.c.b16 %v433, %v431
    %v630 = vpack.c.b16 %v434, %v432
    %v631 = vpack.c.b16 %v437, %v435
    %v632 = vpack.c.b16 %v438, %v436
    %v633 = vpack.c.b16 %v441, %v439
    %v634 = vpack.c.b16 %v442, %v440
    %v635 = vpack.c.b16 %v445, %v443
    %v636 = vpack.c.b16 %v446, %v444
    %v637 = vpack.c.b16 %v449, %v447
    %v638 = vpack.c.b16 %v450, %v448
    %v639 = vpack.c.b16 %v453, %v451
    %v640 = vpack.c.b16 %v454, %v452
    %v641 = vpack.c.b16 %v457, %v455
    %v642 = vpack.c.b16 %v458, %v456
    %v643 = vpack.c.b16 %v461, %v459
    %v644 = vpack.c.b16 %v462, %v460
    %v645 = vpack.c.b16 %v465, %v463
    %v646 = vpack.c.b16 %v466, %v464
    %v647 = vpack.c.b16 %v469, %v467
    %v648 = vpack.c.b16 %v470, %v468
    %v649 = vpack.c.b16 %v473, %v471
    %v650 = vpack.c.b16 %v474, %v472
    %v651 = vpack.c.b16 %v477, %v475
    %v652 = vpack.c.b16 %v478, %v476
    %v653 = vpack.c.b16 %v481, %v479
    %v654 = vpack.c.b16 %v482, %v480
    %v655 = vpack.c.b16 %v485, %v483
    %v656 = vpack.c.b16 %v486, %v484
    %v657 = vpack.c.b16 %v489, %v487
    %v658 = vpack.c.b16 %v490, %v488
    %v659 = vpack.c.b16 %v493, %v491
    %v660 = vpack.c.b16 %v494, %v492
    %v661 = vpack.c.b16 %v497, %v495
    %v662 = vpack.c.b16 %v498, %v496
    %v663 = vpack.c.b16 %v501, %v499
    %v664 = vpack.c.b16 %v502, %v500
    %v665 = vpack.c.b16 %v505, %v503
    %v666 = vpack.c.b16 %v506, %v504
    %v667 = vpack.c.b16 %v509, %v507
    %v668 = vpack.c.b16 %v510, %v508
    %v669 = vpack.c.b16 %v513, %v511
    %v670 = vpack.c.b16 %v514, %v512
    %v671 = vpack.c.b16 %v517, %v515
    %v672 = vpack.c.b16 %v518, %v516
    %v673 = vpack.c.b16 %v521, %v519
    %v674 = vpack.c.b16 %v522, %v520
    %v675 = vpack.c.b16 %v525, %v523
    %v676 = vpack.c.b16 %v526, %v524
    %v677 = vpack.c.b16 %v529, %v527
    %v678 = vpack.c.b16 %v530, %v528
    %v679 = vpack.c.b16 %v533, %v531
    %v680 = vpack.c.b16 %v534, %v532
    %v681 = vpack.c.b16 %v537, %v535
    %v682 = vpack.c.b16 %v538, %v536
    %v683 = vpack.c.b16 %v541, %v539
    %v684 = vpack.c.b16 %v542, %v540
    %v685 = vpack.c.b16 %v545, %v543
    %v686 = vpack.c.b16 %v546, %v544
    %v687 = vpack.c.b16 %v549, %v547
    %v688 = vpack.c.b16 %v550, %v548
    %v689 = vpack.c.b16 %v553, %v551
    %v690 = vpack.c.b16 %v554, %v552
    %v691 = vpack.c.b16 %v557, %v555
    %v692 = vpack.c.b16 %v558, %v556
    %v693 = vpack.c.b16 %v561, %v559
    %v694 = vpack.c.b16 %v562, %v560
    %v695 = vpack.c.b16 %v565, %v563
    %v696 = vpack.c.b16 %v566, %v564
    %v697 = vpack.c.b16 %v569, %v567
    %v698 = vpack.c.b16 %v570, %v568
    %827 = vmatprep.subr.bf16.mxu0 %v572
    %828 = vmatpush1.bf16.msra.mxu0 %v571
    %829 = vmatprep.subr.bf16.mxu0 %v574
    %830 = vmatpush1.bf16.msra.mxu0 %v573
    %831 = vmatprep.subr.bf16.mxu0 %v576
    %832 = vmatpush1.bf16.msra.mxu0 %v575
    %833 = vmatprep.subr.bf16.mxu0 %v578
    %834 = vmatpush1.bf16.msra.mxu0 %v577
    %835 = vmatprep.subr.bf16.mxu0 %v580
    %836 = vmatpush1.bf16.msra.mxu0 %v579
    %837 = vmatprep.subr.bf16.mxu0 %v582
    %838 = vmatpush1.bf16.msra.mxu0 %v581
    %839 = vmatprep.subr.bf16.mxu0 %v584
    %840 = vmatpush1.bf16.msra.mxu0 %v583
    %841 = vmatprep.subr.bf16.mxu0 %v586
    %842 = vmatpush1.bf16.msra.mxu0 %v585
    %843 = vmatprep.subr.bf16.mxu0 %v588
    %844 = vmatpush1.bf16.msra.mxu0 %v587
    %845 = vmatprep.subr.bf16.mxu0 %v590
    %846 = vmatpush1.bf16.msra.mxu0 %v589
    %847 = vmatprep.subr.bf16.mxu0 %v592
    %848 = vmatpush1.bf16.msra.mxu0 %v591
    %849 = vmatprep.subr.bf16.mxu0 %v594
    %850 = vmatpush1.bf16.msra.mxu0 %v593
    %851 = vmatprep.subr.bf16.mxu0 %v596
    %852 = vmatpush1.bf16.msra.mxu0 %v595
    %853 = vmatprep.subr.bf16.mxu0 %v598
    %854 = vmatpush1.bf16.msra.mxu0 %v597
    %855 = vmatprep.subr.bf16.mxu0 %v600
    %856 = vmatpush1.bf16.msra.mxu0 %v599
    %857 = vmatprep.subr.bf16.mxu0 %v602
    %858 = vmatpush1.bf16.msra.mxu0 %v601
    %859 = vmatprep.mubr.bf16.mxu0 %v172
    %860 = vmatmul.mubr.bf16.gmra.mrb[0].mxu0 %v171
    %v861 = vpop.f32.mrb[0].mxu0
    %v862 = vadd.f32 %v152, %v861
    %v863 = vpop.f32.mrb[0].mxu0
    %v864 = vadd.f32 %v156, %v863
    %v865 = vpop.f32.mrb[0].mxu0
    %v866 = vpop.f32.mrb[0].mxu0
    %867 = vdwg.mxu0
    %868 = vmatprep.subr.bf16.mxu0 %v604
    %869 = vmatpush1.bf16.msra.mxu0 %v603
    %870 = vmatprep.subr.bf16.mxu0 %v606
    %871 = vmatpush1.bf16.msra.mxu0 %v605
    %872 = vmatprep.subr.bf16.mxu0 %v608
    %873 = vmatpush1.bf16.msra.mxu0 %v607
    %874 = vmatprep.subr.bf16.mxu0 %v610
    %875 = vmatpush1.bf16.msra.mxu0 %v609
    %876 = vmatprep.subr.bf16.mxu0 %v612
    %877 = vmatpush1.bf16.msra.mxu0 %v611
    %878 = vmatprep.subr.bf16.mxu0 %v614
    %879 = vmatpush1.bf16.msra.mxu0 %v613
    %880 = vmatprep.subr.bf16.mxu0 %v616
    %881 = vmatpush1.bf16.msra.mxu0 %v615
    %882 = vmatprep.subr.bf16.mxu0 %v618
    %883 = vmatpush1.bf16.msra.mxu0 %v617
    %884 = vmatprep.subr.bf16.mxu0 %v620
    %885 = vmatpush1.bf16.msra.mxu0 %v619
    %886 = vmatprep.subr.bf16.mxu0 %v622
    %887 = vmatpush1.bf16.msra.mxu0 %v621
    %888 = vmatprep.subr.bf16.mxu0 %v624
    %889 = vmatpush1.bf16.msra.mxu0 %v623
    %890 = vmatprep.subr.bf16.mxu0 %v626
    %891 = vmatpush1.bf16.msra.mxu0 %v625
    %892 = vmatprep.subr.bf16.mxu0 %v628
    %893 = vmatpush1.bf16.msra.mxu0 %v627
    %894 = vmatprep.subr.bf16.mxu0 %v630
    %895 = vmatpush1.bf16.msra.mxu0 %v629
    %896 = vmatprep.subr.bf16.mxu0 %v632
    %897 = vmatpush1.bf16.msra.mxu0 %v631
    %898 = vmatprep.subr.bf16.mxu0 %v634
    %899 = vmatpush1.bf16.msra.mxu0 %v633
    %900 = vmatprep.mubr.bf16.mxu0 %v174
    %901 = vmatmul.mubr.bf16.gmra.mrb[0].mxu0 %v173
    %v902 = vpop.f32.mrb[0].mxu0
    %v903 = vadd.f32 %v862, %v902
    %v904 = vpop.f32.mrb[0].mxu0
    %v905 = vadd.f32 %v864, %v904
    %v906 = vpop.f32.mrb[0].mxu0
    %v907 = vpop.f32.mrb[0].mxu0
    %908 = vdwg.mxu0
    %909 = vmatprep.subr.bf16.mxu0 %v636
    %910 = vmatpush1.bf16.msra.mxu0 %v635
    %911 = vmatprep.subr.bf16.mxu0 %v638
    %912 = vmatpush1.bf16.msra.mxu0 %v637
    %913 = vmatprep.subr.bf16.mxu0 %v640
    %914 = vmatpush1.bf16.msra.mxu0 %v639
    %915 = vmatprep.subr.bf16.mxu0 %v642
    %916 = vmatpush1.bf16.msra.mxu0 %v641
    %917 = vmatprep.subr.bf16.mxu0 %v644
    %918 = vmatpush1.bf16.msra.mxu0 %v643
    %919 = vmatprep.subr.bf16.mxu0 %v646
    %920 = vmatpush1.bf16.msra.mxu0 %v645
    %921 = vmatprep.subr.bf16.mxu0 %v648
    %922 = vmatpush1.bf16.msra.mxu0 %v647
    %923 = vmatprep.subr.bf16.mxu0 %v650
    %924 = vmatpush1.bf16.msra.mxu0 %v649
    %925 = vmatprep.subr.bf16.mxu0 %v652
    %926 = vmatpush1.bf16.msra.mxu0 %v651
    %927 = vmatprep.subr.bf16.mxu0 %v654
    %928 = vmatpush1.bf16.msra.mxu0 %v653
    %929 = vmatprep.subr.bf16.mxu0 %v656
    %930 = vmatpush1.bf16.msra.mxu0 %v655
    %931 = vmatprep.subr.bf16.mxu0 %v658
    %932 = vmatpush1.bf16.msra.mxu0 %v657
    %933 = vmatprep.subr.bf16.mxu0 %v660
    %934 = vmatpush1.bf16.msra.mxu0 %v659
    %935 = vmatprep.subr.bf16.mxu0 %v662
    %936 = vmatpush1.bf16.msra.mxu0 %v661
    %937 = vmatprep.subr.bf16.mxu0 %v664
    %938 = vmatpush1.bf16.msra.mxu0 %v663
    %939 = vmatprep.subr.bf16.mxu0 %v666
    %940 = vmatpush1.bf16.msra.mxu0 %v665
    %941 = vmatprep.mubr.bf16.mxu0 %v176
    %942 = vmatmul.mubr.bf16.gmra.mrb[0].mxu0 %v175
    %v943 = vpop.f32.mrb[0].mxu0
    %v944 = vadd.f32 %v903, %v943
    %v945 = vpop.f32.mrb[0].mxu0
    %v946 = vadd.f32 %v905, %v945
    %v947 = vpop.f32.mrb[0].mxu0
    %v948 = vpop.f32.mrb[0].mxu0
    %949 = vdwg.mxu0
    %950 = vmatprep.subr.bf16.mxu0 %v668
    %951 = vmatpush1.bf16.msra.mxu0 %v667
    %952 = vmatprep.subr.bf16.mxu0 %v670
    %953 = vmatpush1.bf16.msra.mxu0 %v669
    %954 = vmatprep.subr.bf16.mxu0 %v672
    %955 = vmatpush1.bf16.msra.mxu0 %v671
    %956 = vmatprep.subr.bf16.mxu0 %v674
    %957 = vmatpush1.bf16.msra.mxu0 %v673
    %958 = vmatprep.subr.bf16.mxu0 %v676
    %959 = vmatpush1.bf16.msra.mxu0 %v675
    %960 = vmatprep.subr.bf16.mxu0 %v678
    %961 = vmatpush1.bf16.msra.mxu0 %v677
    %962 = vmatprep.subr.bf16.mxu0 %v680
    %963 = vmatpush1.bf16.msra.mxu0 %v679
    %964 = vmatprep.subr.bf16.mxu0 %v682
    %965 = vmatpush1.bf16.msra.mxu0 %v681
    %966 = vmatprep.subr.bf16.mxu0 %v684
    %967 = vmatpush1.bf16.msra.mxu0 %v683
    %968 = vmatprep.subr.bf16.mxu0 %v686
    %969 = vmatpush1.bf16.msra.mxu0 %v685
    %970 = vmatprep.subr.bf16.mxu0 %v688
    %971 = vmatpush1.bf16.msra.mxu0 %v687
    %972 = vmatprep.subr.bf16.mxu0 %v690
    %973 = vmatpush1.bf16.msra.mxu0 %v689
    %974 = vmatprep.subr.bf16.mxu0 %v692
    %975 = vmatpush1.bf16.msra.mxu0 %v691
    %976 = vmatprep.subr.bf16.mxu0 %v694
    %977 = vmatpush1.bf16.msra.mxu0 %v693
    %978 = vmatprep.subr.bf16.mxu0 %v696
    %979 = vmatpush1.bf16.msra.mxu0 %v695
    %980 = vmatprep.subr.bf16.mxu0 %v698
    %981 = vmatpush1.bf16.msra.mxu0 %v697
    %982 = vmatprep.mubr.bf16.mxu0 %v178
    %983 = vmatmul.mubr.bf16.gmra.mrb[0].mxu0 %v177
    %v984 = vpop.f32.mrb[0].mxu0
    %v985 = vadd.f32 %v944, %v984
    %v986 = vpop.f32.mrb[0].mxu0
    %v987 = vadd.f32 %v946, %v986
    %v988 = vpop.f32.mrb[0].mxu0
    %v989 = vpop.f32.mrb[0].mxu0
    %990 = vdwg.mxu0
    %991 = vst [vmem:[#allocation2] sm:$0xff] %v985
    %992 = vst [vmem:[#allocation2 + $0x8] sm:$0xff] %v987
    // Predicated region
    $region14: #{classifier_swint_forward.1} parent=1 // pred_check
      _
    $region15: #{classifier_swint_forward.1} parent=1 // pred_check_branch
      %994 = sbr.rel (0) target = $region17
    $region16: #{classifier_swint_forward.1} parent=1 // pred_region
      %s996 = ssub.s32 256, 256
      %997 = vsyncadd [#allocation3], %s996
      %s999 = sshll.u32 [#allocation2], 4
      %s1000 = int_to_ptr.vmem [resolvable:$true] %s999
      %1002 = dma.vmem_to_hbm [thread:$0]  %s1000, 256, %s3, [#allocation3]
    $region17: #{classifier_swint_forward.1} parent=1 // pred_fallthru
      _
    // Predicated region
    $region18: #{classifier_swint_forward.1} parent=1 // pred_check
      _
    $region19: #{classifier_swint_forward.1} parent=1 // pred_check_branch
      %1004 = sbr.rel (0) target = $region21
    $region20: #{classifier_swint_forward.1} parent=1 // pred_region
      %1005 = dma.done [#allocation3], 256
    $region21: #{classifier_swint_forward.1} parent=1 // pred_fallthru
      _
    %1006 = vsyncpa [#allocation3], 1

</llo_original>
